<compile_context>
chip_gen: v7x
topology: tpu7x:2x2x1
jax: 0.10.0
libtpu: 0.0.40
codegen_flags: <defaults>
</compile_context>

<pallas_src>
import functools

import jax
import jax.numpy as jnp
from jax.experimental import pallas as pl
from jax.experimental.pallas import tpu as pltpu

HIDDEN_SIZES = [64, 64]
TILE_B = 1024  # batch tile upper bound; tiles + ~90 KB of weights stay far under VMEM


def _round_up(n, m):
    return ((n + m - 1) // m) * m


def dqn_kernel(x_ref, w1_ref, b1_ref, w2_ref, b2_ref, w3_ref, b3_ref, o_ref):
    wdt = w1_ref.dtype  # f32 by default; bf16 if prepare_params used bf16 weights
    x = x_ref[...].astype(wdt)
    # Layer 1: Linear + ReLU (hidden operands lane-dense: N = 128)
    h = jnp.dot(x, w1_ref[...], preferred_element_type=jnp.float32) + b1_ref[...]
    h = jnp.maximum(h, 0.0)
    # Layer 2: Linear + ReLU
    h = jnp.dot(h.astype(wdt), w2_ref[...], preferred_element_type=jnp.float32) + b2_ref[...]
    h = jnp.maximum(h, 0.0)
    # Output layer: Linear (no activation), narrow f_out-wide store
    o_ref[...] = (
        jnp.dot(h.astype(wdt), w3_ref[...], preferred_element_type=jnp.float32) + b3_ref[...]
    ).astype(o_ref.dtype)


def init_dqn_params(key, input_size, output_size, hidden_sizes=HIDDEN_SIZES):
    """Deterministic PyTorch-style init: U(-1/sqrt(fan_in), 1/sqrt(fan_in)).

    Weights stored as (in, out) so the kernel computes x @ W.
    """
    sizes = [input_size] + list(hidden_sizes) + [output_size]
    params = []
    for fan_in, fan_out in zip(sizes[:-1], sizes[1:]):
        key, kw, kb = jax.random.split(key, 3)
        bound = 1.0 / jnp.sqrt(jnp.asarray(fan_in, jnp.float32))
        w = jax.random.uniform(kw, (fan_in, fan_out), jnp.float32, -bound, bound)
        b = jax.random.uniform(kb, (fan_out,), jnp.float32, -bound, bound)
        params.append((w, b))
    return params


def prepare_params(params, param_dtype=jnp.float32):
    """Pad parameters once: hidden dims -> multiples of 128, output dim left as-is.

    Weights may optionally be stored in bf16 (v6e/v7x MXU-friendly); biases and
    accumulation stay f32. Done at prep time so the per-call hot path is just
    the pallas_call.
    """
    (w1, b1), (w2, b2), (w3, b3) = params
    f_in, h1 = w1.shape
    h2 = w2.shape[1]
    f_out = w3.shape[1]
    h1p = _round_up(h1, 128)
    h2p = _round_up(h2, 128)

    w1p = jnp.zeros((f_in, h1p), jnp.float32).at[:, :h1].set(w1).astype(param_dtype)
    b1p = jnp.zeros((1, h1p), jnp.float32).at[:, :h1].set(b1.reshape(1, -1))
    w2p = jnp.zeros((h1p, h2p), jnp.float32).at[:h1, :h2].set(w2).astype(param_dtype)
    b2p = jnp.zeros((1, h2p), jnp.float32).at[:, :h2].set(b2.reshape(1, -1))
    w3p = jnp.zeros((h2p, f_out), jnp.float32).at[:h2, :].set(w3).astype(param_dtype)
    b3p = b3.reshape(1, f_out).astype(jnp.float32)
    return (w1p, b1p, w2p, b2p, w3p, b3p)


def _choose_batch_tile(B):
    # Small / acting batches: one full-array block (legal even if B % 8 != 0).
    if B < 512:
        return B
    # >= 2 grid steps so the "parallel" batch axis can shard across v7x's two
    # TensorCores; cap at TILE_B; keep the tile a multiple of 8 (sublane).
    return min(TILE_B, _round_up(pl.cdiv(B, 2), 8))


@functools.partial(jax.jit, static_argnames=())
def _identity(x):  # tiny helper to keep main tidy
    return x


def dqn_forward(x, padded_params):
    """Fused 3-layer MLP forward. x: (B, F_in) float32, unpadded features."""
    w1p, b1p, w2p, b2p, w3p, b3p = padded_params
    B, f_in = x.shape
    f_out = w3p.shape[1]

    tile_b = _choose_batch_tile(B)
    pad_b = _round_up(B, tile_b)
    if pad_b != B:
        # Cheap wrapper-side batch pad (< tile_b rows); padded rows are discarded.
        x = jnp.pad(x, ((0, pad_b - B), (0, 0)))
    grid = (pad_b // tile_b,)

    # Advisory cost estimate: lets XLA schedule surrounding ops around the call.
    flops = 2 * pad_b * (f_in * w1p.shape[1] + w2p.shape[0] * w2p.shape[1] + w3p.shape[0] * f_out)
    bytes_accessed = (
        pad_b * (x.dtype.itemsize * f_in + 4 * f_out)
        + sum(int(a.size) * a.dtype.itemsize for a in padded_params)
    )

    const = lambda i: (0, 0)  # weights/biases: same block every grid step (VMEM-resident)
    out = pl.pallas_call(
        dqn_kernel,
        out_shape=jax.ShapeDtypeStruct((pad_b, f_out), jnp.float32),
        grid=grid,
        in_specs=[
            pl.BlockSpec((tile_b, f_in), lambda i: (i, 0)),
            pl.BlockSpec(w1p.shape, const),
            pl.BlockSpec(b1p.shape, const),
            pl.BlockSpec(w2p.shape, const),
            pl.BlockSpec(b2p.shape, const),
            pl.BlockSpec(w3p.shape, const),
            pl.BlockSpec(b3p.shape, const),
        ],
        out_specs=pl.BlockSpec((tile_b, f_out), lambda i: (i, 0)),
        compiler_params=pltpu.CompilerParams(dimension_semantics=("parallel",)),
        cost_estimate=pl.CostEstimate(
            flops=flops, transcendentals=0, bytes_accessed=bytes_accessed
        ),
    )(x, w1p, b1p, w2p, b2p, w3p, b3p)

    if pad_b != B:
        out = out[:B]
    return out


def dqn_reference(x, params):
    (w1, b1), (w2, b2), (w3, b3) = params
    h = jnp.maximum(x @ w1 + b1, 0.0)
    h = jnp.maximum(h @ w2 + b2, 0.0)
    return h @ w3 + b3


if __name__ == "__main__":
    # Navigation (Banana) env: state size 37, action size 4.
    input_size, output_size, batch = 37, 4, 2

    key = jax.random.PRNGKey(0)
    key, kx, kxb, kxc = jax.random.split(key, 4)
    x = jax.random.normal(kx, (batch, input_size), jnp.float32)

    params = init_dqn_params(jax.random.PRNGKey(42), input_size, output_size)
    padded_params = prepare_params(params)  # f32 weights (bf16 optional on v6e/v7x)

    # Small online-acting batch (single full-array block).
    q = dqn_forward(x, padded_params)
    q = jax.block_until_ready(q)
    q_ref = dqn_reference(x, params)
    assert q.shape == (batch, output_size)
    assert jnp.allclose(q, q_ref, atol=1e-5, rtol=1e-5), "mismatch vs reference (small batch)"

    # Replay-buffer-sized batch, non-multiple of the tile: exercises the cdiv
    # grid (>= 2 steps), batch padding, and VMEM-resident weights.
    big_batch = 1000
    xb = jax.random.normal(kxb, (big_batch, input_size), jnp.float32)
    qb = dqn_forward(xb, padded_params)
    qb = jax.block_until_ready(qb)
    qb_ref = dqn_reference(xb, params)
    assert qb.shape == (big_batch, output_size)
    assert jnp.allclose(qb, qb_ref, atol=1e-4, rtol=1e-4), "mismatch vs reference (batched)"

    # Large power-of-two batch: multi-step grid with tile_b = TILE_B.
    huge_batch = 4096
    xc = jax.random.normal(kxc, (huge_batch, input_size), jnp.float32)
    qc = dqn_forward(xc, padded_params)
    qc = jax.block_until_ready(qc)
    qc_ref = dqn_reference(xc, params)
    assert qc.shape == (huge_batch, output_size)
    assert jnp.allclose(qc, qc_ref, atol=1e-4, rtol=1e-4), "mismatch vs reference (large batch)"

    print("KERNEL_OK")
</pallas_src>

<mosaic_0001>
module attributes {stable_mosaic.version = 11 : i64} {
  func.func @dqn_kernel(%arg0: i32, %arg1: memref<2x37xf32, #tpu.memory_space<vmem>>, %arg2: memref<37x128xf32, #tpu.memory_space<vmem>>, %arg3: memref<1x128xf32, #tpu.memory_space<vmem>>, %arg4: memref<128x128xf32, #tpu.memory_space<vmem>>, %arg5: memref<1x128xf32, #tpu.memory_space<vmem>>, %arg6: memref<128x4xf32, #tpu.memory_space<vmem>>, %arg7: memref<1x4xf32, #tpu.memory_space<vmem>>, %arg8: memref<2x4xf32, #tpu.memory_space<vmem>>) attributes {dimension_semantics = [#tpu.dimension_semantics<parallel>], iteration_bounds = array<i64: 1>, scalar_prefetch = 0 : i64, scratch_operands = 0 : i64, tpu.core_type = #tpu.core_type<tc>, window_params = [{transform_indices = @transform_0, window_bounds = array<i64: 2, 37>}, {pipeline_mode = #tpu.pipeline_mode<synchronous>, transform_indices = @transform_1, window_bounds = array<i64: 37, 128>}, {pipeline_mode = #tpu.pipeline_mode<synchronous>, transform_indices = @transform_2, window_bounds = array<i64: 1, 128>}, {pipeline_mode = #tpu.pipeline_mode<synchronous>, transform_indices = @transform_3, window_bounds = array<i64: 128, 128>}, {pipeline_mode = #tpu.pipeline_mode<synchronous>, transform_indices = @transform_4, window_bounds = array<i64: 1, 128>}, {pipeline_mode = #tpu.pipeline_mode<synchronous>, transform_indices = @transform_5, window_bounds = array<i64: 128, 4>}, {pipeline_mode = #tpu.pipeline_mode<synchronous>, transform_indices = @transform_6, window_bounds = array<i64: 1, 4>}, {transform_indices = @transform_7, window_bounds = array<i64: 2, 4>}]} {
    %c0 = arith.constant 0 : index
    %c0_0 = arith.constant 0 : index
    %0 = vector.load %arg1[%c0, %c0_0] : memref<2x37xf32, #tpu.memory_space<vmem>>, vector<2x37xf32>
    %c0_1 = arith.constant 0 : index
    %c0_2 = arith.constant 0 : index
    %1 = vector.load %arg2[%c0_1, %c0_2] : memref<37x128xf32, #tpu.memory_space<vmem>>, vector<37x128xf32>
    %cst = arith.constant dense<0.000000e+00> : vector<2x128xf32>
    %2 = tpu.matmul %0, %1, %cst {dimension_numbers = #tpu.dot_dimension_numbers<[1], [0], [0], [1], [0, 0, 1, 1], [], []>} : vector<2x37xf32>, vector<37x128xf32>, vector<2x128xf32> -> vector<2x128xf32>
    %c0_3 = arith.constant 0 : index
    %c0_4 = arith.constant 0 : index
    %3 = vector.load %arg3[%c0_3, %c0_4] : memref<1x128xf32, #tpu.memory_space<vmem>>, vector<1x128xf32>
    %4 = vector.broadcast %3 : vector<1x128xf32> to vector<2x128xf32>
    %5 = arith.addf %2, %4 : vector<2x128xf32>
    %cst_5 = arith.constant 0.000000e+00 : f32
    %6 = vector.broadcast %cst_5 : f32 to vector<2x128xf32>
    %7 = arith.maximumf %5, %6 : vector<2x128xf32>
    %c0_6 = arith.constant 0 : index
    %c0_7 = arith.constant 0 : index
    %8 = vector.load %arg4[%c0_6, %c0_7] : memref<128x128xf32, #tpu.memory_space<vmem>>, vector<128x128xf32>
    %cst_8 = arith.constant dense<0.000000e+00> : vector<2x128xf32>
    %9 = tpu.matmul %7, %8, %cst_8 {dimension_numbers = #tpu.dot_dimension_numbers<[1], [0], [0], [1], [0, 0, 1, 1], [], []>} : vector<2x128xf32>, vector<128x128xf32>, vector<2x128xf32> -> vector<2x128xf32>
    %c0_9 = arith.constant 0 : index
    %c0_10 = arith.constant 0 : index
    %10 = vector.load %arg5[%c0_9, %c0_10] : memref<1x128xf32, #tpu.memory_space<vmem>>, vector<1x128xf32>
    %11 = vector.broadcast %10 : vector<1x128xf32> to vector<2x128xf32>
    %12 = arith.addf %9, %11 : vector<2x128xf32>
    %cst_11 = arith.constant 0.000000e+00 : f32
    %13 = vector.broadcast %cst_11 : f32 to vector<2x128xf32>
    %14 = arith.maximumf %12, %13 : vector<2x128xf32>
    %c0_12 = arith.constant 0 : index
    %c0_13 = arith.constant 0 : index
    %15 = vector.load %arg6[%c0_12, %c0_13] : memref<128x4xf32, #tpu.memory_space<vmem>>, vector<128x4xf32>
    %cst_14 = arith.constant dense<0.000000e+00> : vector<2x4xf32>
    %16 = tpu.matmul %14, %15, %cst_14 {dimension_numbers = #tpu.dot_dimension_numbers<[1], [0], [0], [1], [0, 0, 1, 1], [], []>} : vector<2x128xf32>, vector<128x4xf32>, vector<2x4xf32> -> vector<2x4xf32>
    %c0_15 = arith.constant 0 : index
    %c0_16 = arith.constant 0 : index
    %17 = vector.load %arg7[%c0_15, %c0_16] : memref<1x4xf32, #tpu.memory_space<vmem>>, vector<1x4xf32>
    %18 = vector.broadcast %17 : vector<1x4xf32> to vector<2x4xf32>
    %19 = arith.addf %16, %18 : vector<2x4xf32>
    %c0_17 = arith.constant 0 : index
    %c0_18 = arith.constant 0 : index
    %20 = vector.load %arg8[%c0_17, %c0_18] : memref<2x4xf32, #tpu.memory_space<vmem>>, vector<2x4xf32>
    tpu.vector_store %arg8[%c0_17, %c0_18], %19 {strides = array<i32>} : memref<2x4xf32, #tpu.memory_space<vmem>>, vector<2x4xf32>,
    return
  }
  func.func @transform_0(%arg0: i32) -> (i32, i32) {
    %c0_i32 = arith.constant 0 : i32
    %c0_i32_0 = arith.constant 0 : i32
    return %arg0, %c0_i32 : i32, i32
  }
  func.func @transform_1(%arg0: i32) -> (i32, i32) {
    %c0_i32 = arith.constant 0 : i32
    %c0_i32_0 = arith.constant 0 : i32
    %c0_i32_1 = arith.constant 0 : i32
    return %c0_i32, %c0_i32_0 : i32, i32
  }
  func.func @transform_2(%arg0: i32) -> (i32, i32) {
    %c0_i32 = arith.constant 0 : i32
    %c0_i32_0 = arith.constant 0 : i32
    %c0_i32_1 = arith.constant 0 : i32
    return %c0_i32, %c0_i32_0 : i32, i32
  }
  func.func @transform_3(%arg0: i32) -> (i32, i32) {
    %c0_i32 = arith.constant 0 : i32
    %c0_i32_0 = arith.constant 0 : i32
    %c0_i32_1 = arith.constant 0 : i32
    return %c0_i32, %c0_i32_0 : i32, i32
  }
  func.func @transform_4(%arg0: i32) -> (i32, i32) {
    %c0_i32 = arith.constant 0 : i32
    %c0_i32_0 = arith.constant 0 : i32
    %c0_i32_1 = arith.constant 0 : i32
    return %c0_i32, %c0_i32_0 : i32, i32
  }
  func.func @transform_5(%arg0: i32) -> (i32, i32) {
    %c0_i32 = arith.constant 0 : i32
    %c0_i32_0 = arith.constant 0 : i32
    %c0_i32_1 = arith.constant 0 : i32
    return %c0_i32, %c0_i32_0 : i32, i32
  }
  func.func @transform_6(%arg0: i32) -> (i32, i32) {
    %c0_i32 = arith.constant 0 : i32
    %c0_i32_0 = arith.constant 0 : i32
    %c0_i32_1 = arith.constant 0 : i32
    return %c0_i32, %c0_i32_0 : i32, i32
  }
  func.func @transform_7(%arg0: i32) -> (i32, i32) {
    %c0_i32 = arith.constant 0 : i32
    %c0_i32_0 = arith.constant 0 : i32
    return %arg0, %c0_i32 : i32, i32
  }
}

</mosaic_0001>

<llo_original>
// kernel: tpu_custom_call.1
$region0: #{tpu_custom_call.1}
  #allocation0 [shape = 'u32[]', space=smem, size = 0x4, offset = 0x4, fixed_abs, tag = 'smem constant byte address 0x4 - core index']
  #allocation1 [shape = 'u32[144,128]{1,0:T(1,128)}', space=vmem, size = 0x12000, scoped, tag = 'internal scratch']
  %s0 = inlined_call_operand.vmem [shape: f32[2,37], index: 0, kind: input, shape index: {}]
  %s1 = inlined_call_operand.hbm [shape: f32[37,128], index: 1, kind: input, shape index: {}]
  %s2 = inlined_call_operand.vmem [shape: f32[1,128], index: 2, kind: input, shape index: {}]
  %s3 = inlined_call_operand.vmem [shape: f32[128,128], index: 3, kind: input, shape index: {}]
  %s4 = inlined_call_operand.vmem [shape: f32[1,128], index: 4, kind: input, shape index: {}]
  %s5 = inlined_call_operand.vmem [shape: f32[128,4], index: 5, kind: input, shape index: {}]
  %s6 = inlined_call_operand.vmem [shape: f32[1,4], index: 6, kind: input, shape index: {}]
  %s7 = inlined_call_operand.hbm [shape: f32[2,4], index: 7, kind: output, shape index: {}]
  %s8 = sld [smem:[#allocation0]]
  $region42: #{tpu_custom_call.1} parent=0
    _
  %s10 = ssub.s32 1, %s8
  %s11 = scalar_select 0, %s10, %s8
  $region1: #{tpu_custom_call.1} parent=0
    #allocation2 [shape = 'u8[20480]{0}', space=vmem, size = 0x5000, scoped, tag = 'input window, operand 1, single buffered']
    #allocation3 [shape = 's32[1]{0}', space=sflag, size = 0x4, scoped, tag = 'scoped memory for tpu_custom_call.1']
    #allocation4 [shape = 's32[1]{0}', space=sflag, size = 0x4, scoped, tag = 'scoped memory for tpu_custom_call.1']
    #allocation5 [shape = 'u8[1024]{0}', space=vmem, size = 0x400, scoped, tag = 'output window, operand 0, single buffered']
    %12 = vsyncpa [#allocation3], 0
    %13 = vsyncpa [#allocation4], 0
    // Predicated region
    $region2: #{tpu_custom_call.1} parent=1 // pred_check
      _
    $region3: #{tpu_custom_call.1} parent=1 // pred_check_branch
      %15 = sbr.rel (0) target = $region5
    $region4: #{tpu_custom_call.1} parent=1 // pred_region
      _
    $region5: #{tpu_custom_call.1} parent=1 // pred_fallthru
      _
    // Predicated region
    $region6: #{tpu_custom_call.1} parent=1 // pred_check
      _
    $region7: #{tpu_custom_call.1} parent=1 // pred_check_branch
      %17 = sbr.rel (0) target = $region9
    $region8: #{tpu_custom_call.1} parent=1 // pred_region
      %s19 = ssub.s32 640, 640
      %20 = vsyncadd [#allocation3], %s19
      %s21 = sshll.u32 [#allocation2], 4
      %s22 = int_to_ptr.vmem [resolvable:$true] %s21
      %27 = dma.hbm_to_vmem [thread:$0]  %s1, 640, %s22, [#allocation3], 128, 128, 8
    $region9: #{tpu_custom_call.1} parent=1 // pred_fallthru
      _
    // Predicated region
    $region10: #{tpu_custom_call.1} parent=1 // pred_check
      _
    $region11: #{tpu_custom_call.1} parent=1 // pred_check_branch
      %29 = sbr.rel (0) target = $region13
    $region12: #{tpu_custom_call.1} parent=1 // pred_region
      _
    $region13: #{tpu_custom_call.1} parent=1 // pred_fallthru
      _
    // Predicated region
    $region14: #{tpu_custom_call.1} parent=1 // pred_check
      _
    $region15: #{tpu_custom_call.1} parent=1 // pred_check_branch
      %31 = sbr.rel (0) target = $region17
    $region16: #{tpu_custom_call.1} parent=1 // pred_region
      _
    $region17: #{tpu_custom_call.1} parent=1 // pred_fallthru
      _
    // Predicated region
    $region18: #{tpu_custom_call.1} parent=1 // pred_check
      _
    $region19: #{tpu_custom_call.1} parent=1 // pred_check_branch
      %33 = sbr.rel (0) target = $region21
    $region20: #{tpu_custom_call.1} parent=1 // pred_region
      _
    $region21: #{tpu_custom_call.1} parent=1 // pred_fallthru
      _
    // Predicated region
    $region22: #{tpu_custom_call.1} parent=1 // pred_check
      _
    $region23: #{tpu_custom_call.1} parent=1 // pred_check_branch
      %35 = sbr.rel (0) target = $region25
    $region24: #{tpu_custom_call.1} parent=1 // pred_region
      _
    $region25: #{tpu_custom_call.1} parent=1 // pred_fallthru
      _
    // Predicated region
    $region26: #{tpu_custom_call.1} parent=1 // pred_check
      _
    $region27: #{tpu_custom_call.1} parent=1 // pred_check_branch
      %37 = sbr.rel (0) target = $region29
    $region28: #{tpu_custom_call.1} parent=1 // pred_region
      _
    $region29: #{tpu_custom_call.1} parent=1 // pred_fallthru
      _
    // Predicated region
    $region30: #{tpu_custom_call.1} parent=1 // pred_check
      _
    $region31: #{tpu_custom_call.1} parent=1 // pred_check_branch
      %39 = sbr.rel (0) target = $region33
    $region32: #{tpu_custom_call.1} parent=1 // pred_region
      %40 = dma.done [#allocation3], 640
    $region33: #{tpu_custom_call.1} parent=1 // pred_fallthru
      _
    %v41 = vld [vmem:[%s0] sm:$0x3]
    %v42 = vld [vmem:[#allocation2] sm:$0xff]
    %v43 = vld [vmem:[#allocation2 + $0x8] sm:$0xff]
    %v44 = vld [vmem:[#allocation2 + $0x10] sm:$0xff]
    %v45 = vld [vmem:[#allocation2 + $0x18] sm:$0xff]
    %v46 = vld [vmem:[#allocation2 + $0x20] sm:$0x1f]
    %v47 = vld [vmem:[%s2] sm:$0x1]
    %v49 = vlaneseq
    %v50 = vshrl.u32 %v49, 7
    %v51 = vsub.s32 0, %v50
    %v52 = vrot.slane %v47, %v51
    %vm54 = vcmask 302080
    %v56 = vsel %vm54, %v41, 0
    %vm58 = vcmask 1044480
    %v60 = vsel %vm58, %v46, 0
    %62 = vmatprep.subr.mxu0 0.0
    %63 = vmatpush1.msra.mxu0 %v42
    %64 = vmatprep.subr.mxu0 0.0
    %65 = vmatpush1.msra.mxu0 %v43
    %66 = vmatprep.subr.mxu0 0.0
    %67 = vmatpush1.msra.mxu0 %v44
    %68 = vmatprep.subr.mxu0 0.0
    %69 = vmatpush1.msra.mxu0 %v45
    %70 = vmatprep.subr.mxu0 0.0
    %71 = vmatpush1.msra.mxu0 %v60
    %72 = vmatprep.subr.mxu0 0.0
    %73 = vmatpush1.msra.mxu0 0.0
    %74 = vmatprep.subr.mxu0 0.0
    %75 = vmatpush1.msra.mxu0 0.0
    %76 = vmatprep.subr.mxu0 0.0
    %77 = vmatpush1.msra.mxu0 0.0
    %78 = vmatprep.subr.mxu0 0.0
    %79 = vmatpush1.msra.mxu0 0.0
    %80 = vmatprep.subr.mxu0 0.0
    %81 = vmatpush1.msra.mxu0 0.0
    %82 = vmatprep.subr.mxu0 0.0
    %83 = vmatpush1.msra.mxu0 0.0
    %84 = vmatprep.subr.mxu0 0.0
    %85 = vmatpush1.msra.mxu0 0.0
    %86 = vmatprep.subr.mxu0 0.0
    %87 = vmatpush1.msra.mxu0 0.0
    %88 = vmatprep.subr.mxu0 0.0
    %89 = vmatpush1.msra.mxu0 0.0
    %90 = vmatprep.subr.mxu0 0.0
    %91 = vmatpush1.msra.mxu0 0.0
    %92 = vmatprep.subr.mxu0 0.0
    %93 = vmatpush1.msra.mxu0 0.0
    %94 = vmatprep.subr.mxu0 0.0
    %95 = vmatpush1.msra.mxu0 0.0
    %96 = vmatprep.subr.mxu0 0.0
    %97 = vmatpush1.msra.mxu0 0.0
    %98 = vmatprep.subr.mxu0 0.0
    %99 = vmatpush1.msra.mxu0 0.0
    %100 = vmatprep.subr.mxu0 0.0
    %101 = vmatpush1.msra.mxu0 0.0
    %102 = vmatprep.subr.mxu0 0.0
    %103 = vmatpush1.msra.mxu0 0.0
    %104 = vmatprep.subr.mxu0 0.0
    %105 = vmatpush1.msra.mxu0 0.0
    %106 = vmatprep.subr.mxu0 0.0
    %107 = vmatpush1.msra.mxu0 0.0
    %108 = vmatprep.subr.mxu0 0.0
    %109 = vmatpush1.msra.mxu0 0.0
    %110 = vmatprep.subr.mxu0 0.0
    %111 = vmatpush1.msra.mxu0 0.0
    %112 = vmatprep.subr.mxu0 0.0
    %113 = vmatpush1.msra.mxu0 0.0
    %114 = vmatprep.subr.mxu0 0.0
    %115 = vmatpush1.msra.mxu0 0.0
    %116 = vmatprep.subr.mxu0 0.0
    %117 = vmatpush1.msra.mxu0 0.0
    %118 = vmatprep.subr.mxu0 0.0
    %119 = vmatpush1.msra.mxu0 0.0
    %120 = vmatprep.subr.mxu0 0.0
    %121 = vmatpush1.msra.mxu0 0.0
    %122 = vmatprep.subr.mxu0 0.0
    %123 = vmatpush1.msra.mxu0 0.0
    %124 = vmatprep.subr.mxu0 0.0
    %125 = vmatpush1.msra.mxu0 0.0
    %126 = vmatprep.mubr.f32.mxu0 0.0
    %127 = vmatmul.mubr.f32.gmra.mrb[0].mxu0 %v56
    %v128 = vpop.f32.mrb[0].mxu0
    %v129 = vadd.f32 %v52, %v128
    %v130 = vpop.f32.mrb[0].mxu0
    %131 = vdwg.mxu0
    %v132 = vmax.f32 %v129, 0.0
    %v133 = vld [vmem:[%s3] sm:$0xff]
    %v134 = vld [vmem:[%s3 + $0x8] sm:$0xff]
    %v135 = vld [vmem:[%s3 + $0x10] sm:$0xff]
    %v136 = vld [vmem:[%s3 + $0x18] sm:$0xff]
    %v137 = vld [vmem:[%s3 + $0x20] sm:$0xff]
    %v138 = vld [vmem:[%s3 + $0x28] sm:$0xff]
    %v139 = vld [vmem:[%s3 + $0x30] sm:$0xff]
    %v140 = vld [vmem:[%s3 + $0x38] sm:$0xff]
    %v141 = vld [vmem:[%s3 + $0x40] sm:$0xff]
    %v142 = vld [vmem:[%s3 + $0x48] sm:$0xff]
    %v143 = vld [vmem:[%s3 + $0x50] sm:$0xff]
    %v144 = vld [vmem:[%s3 + $0x58] sm:$0xff]
    %v145 = vld [vmem:[%s3 + $0x60] sm:$0xff]
    %v146 = vld [vmem:[%s3 + $0x68] sm:$0xff]
    %v147 = vld [vmem:[%s3 + $0x70] sm:$0xff]
    %v148 = vld [vmem:[%s3 + $0x78] sm:$0xff]
    %v149 = vld [vmem:[%s4] sm:$0x1]
    %v151 = vlaneseq
    %v152 = vshrl.u32 %v151, 7
    %v153 = vsub.s32 0, %v152
    %v154 = vrot.slane %v149, %v153
    %156 = vmatprep.subr.mxu0 0.0
    %157 = vmatpush1.msra.mxu0 %v133
    %158 = vmatprep.subr.mxu0 0.0
    %159 = vmatpush1.msra.mxu0 %v134
    %160 = vmatprep.subr.mxu0 0.0
    %161 = vmatpush1.msra.mxu0 %v135
    %162 = vmatprep.subr.mxu0 0.0
    %163 = vmatpush1.msra.mxu0 %v136
    %164 = vmatprep.subr.mxu0 0.0
    %165 = vmatpush1.msra.mxu0 %v137
    %166 = vmatprep.subr.mxu0 0.0
    %167 = vmatpush1.msra.mxu0 %v138
    %168 = vmatprep.subr.mxu0 0.0
    %169 = vmatpush1.msra.mxu0 %v139
    %170 = vmatprep.subr.mxu0 0.0
    %171 = vmatpush1.msra.mxu0 %v140
    %172 = vmatprep.subr.mxu0 0.0
    %173 = vmatpush1.msra.mxu0 %v141
    %174 = vmatprep.subr.mxu0 0.0
    %175 = vmatpush1.msra.mxu0 %v142
    %176 = vmatprep.subr.mxu0 0.0
    %177 = vmatpush1.msra.mxu0 %v143
    %178 = vmatprep.subr.mxu0 0.0
    %179 = vmatpush1.msra.mxu0 %v144
    %180 = vmatprep.subr.mxu0 0.0
    %181 = vmatpush1.msra.mxu0 %v145
    %182 = vmatprep.subr.mxu0 0.0
    %183 = vmatpush1.msra.mxu0 %v146
    %184 = vmatprep.subr.mxu0 0.0
    %185 = vmatpush1.msra.mxu0 %v147
    %186 = vmatprep.subr.mxu0 0.0
    %187 = vmatpush1.msra.mxu0 %v148
    %188 = vmatprep.subr.mxu0 0.0
    %189 = vmatpush1.msra.mxu0 0.0
    %190 = vmatprep.subr.mxu0 0.0
    %191 = vmatpush1.msra.mxu0 0.0
    %192 = vmatprep.subr.mxu0 0.0
    %193 = vmatpush1.msra.mxu0 0.0
    %194 = vmatprep.subr.mxu0 0.0
    %195 = vmatpush1.msra.mxu0 0.0
    %196 = vmatprep.subr.mxu0 0.0
    %197 = vmatpush1.msra.mxu0 0.0
    %198 = vmatprep.subr.mxu0 0.0
    %199 = vmatpush1.msra.mxu0 0.0
    %200 = vmatprep.subr.mxu0 0.0
    %201 = vmatpush1.msra.mxu0 0.0
    %202 = vmatprep.subr.mxu0 0.0
    %203 = vmatpush1.msra.mxu0 0.0
    %204 = vmatprep.subr.mxu0 0.0
    %205 = vmatpush1.msra.mxu0 0.0
    %206 = vmatprep.subr.mxu0 0.0
    %207 = vmatpush1.msra.mxu0 0.0
    %208 = vmatprep.subr.mxu0 0.0
    %209 = vmatpush1.msra.mxu0 0.0
    %210 = vmatprep.subr.mxu0 0.0
    %211 = vmatpush1.msra.mxu0 0.0
    %212 = vmatprep.subr.mxu0 0.0
    %213 = vmatpush1.msra.mxu0 0.0
    %214 = vmatprep.subr.mxu0 0.0
    %215 = vmatpush1.msra.mxu0 0.0
    %216 = vmatprep.subr.mxu0 0.0
    %217 = vmatpush1.msra.mxu0 0.0
    %218 = vmatprep.subr.mxu0 0.0
    %219 = vmatpush1.msra.mxu0 0.0
    %220 = vmatprep.mubr.f32.mxu0 0.0
    %221 = vmatmul.mubr.f32.gmra.mrb[0].mxu0 %v132
    %v222 = vpop.f32.mrb[0].mxu0
    %v223 = vadd.f32 %v154, %v222
    %v224 = vpop.f32.mrb[0].mxu0
    %225 = vdwg.mxu0
    %v226 = vmax.f32 %v223, 0.0
    %v227 = vld [vmem:[%s5] sm:$0xff]
    %v228 = vld [vmem:[%s5 + $0x8] sm:$0xff]
    %v229 = vld [vmem:[%s5 + $0x10] sm:$0xff]
    %v230 = vld [vmem:[%s5 + $0x18] sm:$0xff]
    %v231 = vld [vmem:[%s5 + $0x20] sm:$0xff]
    %v232 = vld [vmem:[%s5 + $0x28] sm:$0xff]
    %v233 = vld [vmem:[%s5 + $0x30] sm:$0xff]
    %v234 = vld [vmem:[%s5 + $0x38] sm:$0xff]
    %v235 = vld [vmem:[%s5 + $0x40] sm:$0xff]
    %v236 = vld [vmem:[%s5 + $0x48] sm:$0xff]
    %v237 = vld [vmem:[%s5 + $0x50] sm:$0xff]
    %v238 = vld [vmem:[%s5 + $0x58] sm:$0xff]
    %v239 = vld [vmem:[%s5 + $0x60] sm:$0xff]
    %v240 = vld [vmem:[%s5 + $0x68] sm:$0xff]
    %v241 = vld [vmem:[%s5 + $0x70] sm:$0xff]
    %v242 = vld [vmem:[%s5 + $0x78] sm:$0xff]
    %v243 = vld [vmem:[%s6] sm:$0x1]
    %v245 = vlaneseq
    %v246 = vshrl.u32 %v245, 7
    %v247 = vsub.s32 0, %v246
    %v248 = vrot.slane %v243, %v247
    %250 = vmatprep.subr.mxu0 0.0
    %251 = vmatpush1.msra.mxu0 %v227
    %252 = vmatprep.subr.mxu0 0.0
    %253 = vmatpush1.msra.mxu0 %v228
    %254 = vmatprep.subr.mxu0 0.0
    %255 = vmatpush1.msra.mxu0 %v229
    %256 = vmatprep.subr.mxu0 0.0
    %257 = vmatpush1.msra.mxu0 %v230
    %258 = vmatprep.subr.mxu0 0.0
    %259 = vmatpush1.msra.mxu0 %v231
    %260 = vmatprep.subr.mxu0 0.0
    %261 = vmatpush1.msra.mxu0 %v232
    %262 = vmatprep.subr.mxu0 0.0
    %263 = vmatpush1.msra.mxu0 %v233
    %264 = vmatprep.subr.mxu0 0.0
    %265 = vmatpush1.msra.mxu0 %v234
    %266 = vmatprep.subr.mxu0 0.0
    %267 = vmatpush1.msra.mxu0 %v235
    %268 = vmatprep.subr.mxu0 0.0
    %269 = vmatpush1.msra.mxu0 %v236
    %270 = vmatprep.subr.mxu0 0.0
    %271 = vmatpush1.msra.mxu0 %v237
    %272 = vmatprep.subr.mxu0 0.0
    %273 = vmatpush1.msra.mxu0 %v238
    %274 = vmatprep.subr.mxu0 0.0
    %275 = vmatpush1.msra.mxu0 %v239
    %276 = vmatprep.subr.mxu0 0.0
    %277 = vmatpush1.msra.mxu0 %v240
    %278 = vmatprep.subr.mxu0 0.0
    %279 = vmatpush1.msra.mxu0 %v241
    %280 = vmatprep.subr.mxu0 0.0
    %281 = vmatpush1.msra.mxu0 %v242
    %282 = vmatprep.subr.mxu0 0.0
    %283 = vmatpush1.msra.mxu0 0.0
    %284 = vmatprep.subr.mxu0 0.0
    %285 = vmatpush1.msra.mxu0 0.0
    %286 = vmatprep.subr.mxu0 0.0
    %287 = vmatpush1.msra.mxu0 0.0
    %288 = vmatprep.subr.mxu0 0.0
    %289 = vmatpush1.msra.mxu0 0.0
    %290 = vmatprep.subr.mxu0 0.0
    %291 = vmatpush1.msra.mxu0 0.0
    %292 = vmatprep.subr.mxu0 0.0
    %293 = vmatpush1.msra.mxu0 0.0
    %294 = vmatprep.subr.mxu0 0.0
    %295 = vmatpush1.msra.mxu0 0.0
    %296 = vmatprep.subr.mxu0 0.0
    %297 = vmatpush1.msra.mxu0 0.0
    %298 = vmatprep.subr.mxu0 0.0
    %299 = vmatpush1.msra.mxu0 0.0
    %300 = vmatprep.subr.mxu0 0.0
    %301 = vmatpush1.msra.mxu0 0.0
    %302 = vmatprep.subr.mxu0 0.0
    %303 = vmatpush1.msra.mxu0 0.0
    %304 = vmatprep.subr.mxu0 0.0
    %305 = vmatpush1.msra.mxu0 0.0
    %306 = vmatprep.subr.mxu0 0.0
    %307 = vmatpush1.msra.mxu0 0.0
    %308 = vmatprep.subr.mxu0 0.0
    %309 = vmatpush1.msra.mxu0 0.0
    %310 = vmatprep.subr.mxu0 0.0
    %311 = vmatpush1.msra.mxu0 0.0
    %312 = vmatprep.subr.mxu0 0.0
    %313 = vmatpush1.msra.mxu0 0.0
    %314 = vmatprep.mubr.f32.mxu0 0.0
    %315 = vmatmul.mubr.f32.gmra.mrb[0].mxu0 %v226
    %v316 = vpop.f32.mrb[0].mxu0
    %v317 = vadd.f32 %v248, %v316
    %v318 = vpop.f32.mrb[0].mxu0
    %319 = vdwg.mxu0
    %vm320 = vcmask 25600
    %321 = vst.msk [vmem:[#allocation5] sm:$0x3] %vm320, %v317
    // Predicated region
    $region34: #{tpu_custom_call.1} parent=1 // pred_check
      _
    $region35: #{tpu_custom_call.1} parent=1 // pred_check_branch
      %323 = sbr.rel (0) target = $region37
    $region36: #{tpu_custom_call.1} parent=1 // pred_region
      %s325 = ssub.s32 32, 32
      %326 = vsyncadd [#allocation4], %s325
      %s328 = sshll.u32 [#allocation5], 4
      %s329 = int_to_ptr.vmem [resolvable:$true] %s328
      %331 = dma.vmem_to_hbm [thread:$0]  %s329, 32, %s7, [#allocation4]
    $region37: #{tpu_custom_call.1} parent=1 // pred_fallthru
      _
    // Predicated region
    $region38: #{tpu_custom_call.1} parent=1 // pred_check
      _
    $region39: #{tpu_custom_call.1} parent=1 // pred_check_branch
      %333 = sbr.rel (0) target = $region41
    $region40: #{tpu_custom_call.1} parent=1 // pred_region
      %334 = dma.done [#allocation4], 32
    $region41: #{tpu_custom_call.1} parent=1 // pred_fallthru
      _
    %335 = vsyncpa [#allocation3], 1
    %336 = vsyncpa [#allocation4], 1

</llo_original>
